<compile_context>
chip_gen: v7x
topology: tpu7x:2x2x1
jax: 0.10.0
libtpu: 0.0.40
codegen_flags: <defaults>
</compile_context>

<pallas_src>
import functools

import jax
import jax.numpy as jnp
import numpy as np
from jax import lax
from jax.experimental import pallas as pl
from jax.experimental.pallas import tpu as pltpu


def lstm_kernel(x_ref, wih_ref, whh_ref, b_ref, h_ref, xw_sc, c_sc,
                *, seq_len, t_blk, batch, hidden):
    """One grid step = one time chunk of t_blk steps.

    x_ref  : (t_blk*B, E)  chunk of embedded inputs (time-major, flattened)
    h_ref  : (B, H)        resident output block; doubles as the running h state
    xw_sc  : (t_blk*B, 4H) VMEM scratch for the chunk's input projection
    c_sc   : (B, H)        VMEM scratch for the running c state
    """
    chunk = pl.program_id(0)
    B = batch
    H = hidden

    @pl.when(chunk == 0)
    def _():
        h_ref[...] = jnp.zeros_like(h_ref)
        c_sc[...] = jnp.zeros_like(c_sc)

    # Input projection for the whole chunk in a single MXU call; bias broadcast
    # happens once per chunk, not once per timestep.
    xw_sc[...] = (
        jnp.dot(x_ref[...], wih_ref[...], preferred_element_type=jnp.float32)
        + b_ref[...]
    )

    whh = whh_ref[...]  # hoisted out of the time loop

    needs_mask = (seq_len % t_blk) != 0  # static (Python) — toy case: False

    def step(t, carry):
        h, c = carry
        row = pl.multiple_of(t * B, B)
        g_x = xw_sc[pl.ds(row, B), :]                       # (B, 4H)
        gates = g_x + jnp.dot(h, whh, preferred_element_type=jnp.float32)

        # Full-width transcendentals on the EUP, then static lane slices.
        sig = jax.nn.sigmoid(gates)                         # (B, 4H)
        tnh = jnp.tanh(gates)                               # (B, 4H)
        i_g = sig[:, 0:H]
        f_g = sig[:, H:2 * H]
        o_g = sig[:, 3 * H:4 * H]
        g_g = tnh[:, 2 * H:3 * H]

        c_new = f_g * c + i_g * g_g
        h_new = o_g * jnp.tanh(c_new)

        if needs_mask:
            # Last chunk may contain padded timesteps: freeze the state there.
            valid = (chunk * t_blk + t) < seq_len
            h_new = jnp.where(valid, h_new, h)
            c_new = jnp.where(valid, c_new, c)
        return h_new, c_new

    h_f, c_f = lax.fori_loop(0, t_blk, step, (h_ref[...], c_sc[...]),
                             unroll=(t_blk <= 32))
    h_ref[...] = h_f
    c_sc[...] = c_f


def lstm_final_hidden(x_tbe, wih_t, whh_t, bias, *, t_blk=256):
    """x_tbe: (T, B, E) time-major embedded inputs. Returns final hidden (B, H)."""
    T, B, E = x_tbe.shape
    H = whh_t.shape[0]

    t_blk = min(t_blk, T)
    num_chunks = (T + t_blk - 1) // t_blk
    T_pad = num_chunks * t_blk
    if T_pad != T:
        x_tbe = jnp.pad(x_tbe, ((0, T_pad - T), (0, 0), (0, 0)))

    # Flatten (T_pad, B, E) -> (T_pad*B, E): rows stay time-major (free reshape).
    x2d = x_tbe.reshape(T_pad * B, E)

    kernel = functools.partial(
        lstm_kernel, seq_len=T, t_blk=t_blk, batch=B, hidden=H)

    return pl.pallas_call(
        kernel,
        out_shape=jax.ShapeDtypeStruct((B, H), jnp.float32),
        grid=(num_chunks,),
        in_specs=[
            pl.BlockSpec((t_blk * B, E), lambda c: (c, 0)),  # x chunk
            pl.BlockSpec((E, 4 * H), lambda c: (0, 0)),      # W_ih^T (resident)
            pl.BlockSpec((H, 4 * H), lambda c: (0, 0)),      # W_hh^T (resident)
            pl.BlockSpec((1, 4 * H), lambda c: (0, 0)),      # bias   (resident)
        ],
        out_specs=pl.BlockSpec((B, H), lambda c: (0, 0)),    # h (resident state)
        scratch_shapes=[
            pltpu.VMEM((t_blk * B, 4 * H), jnp.float32),     # chunk input proj
            pltpu.VMEM((B, H), jnp.float32),                 # c state
        ],
        compiler_params=pltpu.CompilerParams(
            dimension_semantics=("arbitrary",),              # time recurrence
        ),
    )(x2d, wih_t, whh_t, bias)


@jax.jit
def encoder_forward(tokens, params):
    """tokens: (B, T) int32. Returns (B, H) float32, matching torch h.squeeze(0)."""
    emb = params["embedding"]                        # (V+1, E), row 0 zeros (padding_idx=0)
    # Gather directly in time-major order (transpose the tiny int matrix, not
    # the float activations).
    # TODO(synk): embedding gather stays in plain-JAX glue (in-kernel VMEM gather
    # of the 27x64 table is possible but not worth the complexity here).
    x = jnp.take(emb, tokens.T, axis=0)              # (T, B, E)
    return lstm_final_hidden(
        x,
        params["w_ih"].T,                            # (E, 4H)
        params["w_hh"].T,                            # (H, 4H)
        (params["b_ih"] + params["b_hh"])[None, :],  # (1, 4H)
    )


def init_params(key, vocab_size, emb_dim, hidden_dim):
    k_emb, k_wih, k_whh, k_bih, k_bhh = jax.random.split(key, 5)
    # nn.Embedding: N(0,1), padding_idx=0 row zeroed.
    embedding = jax.random.normal(k_emb, (vocab_size + 1, emb_dim), jnp.float32)
    embedding = embedding.at[0].set(0.0)
    # nn.LSTM: U(-1/sqrt(H), 1/sqrt(H)), gate order i,f,g,o.
    s = 1.0 / np.sqrt(hidden_dim)
    w_ih = jax.random.uniform(k_wih, (4 * hidden_dim, emb_dim), jnp.float32, -s, s)
    w_hh = jax.random.uniform(k_whh, (4 * hidden_dim, hidden_dim), jnp.float32, -s, s)
    b_ih = jax.random.uniform(k_bih, (4 * hidden_dim,), jnp.float32, -s, s)
    b_hh = jax.random.uniform(k_bhh, (4 * hidden_dim,), jnp.float32, -s, s)
    return dict(embedding=embedding, w_ih=w_ih, w_hh=w_hh, b_ih=b_ih, b_hh=b_hh)


def encoder_forward_ref(tokens, params):
    """Pure-JAX reference (lax.scan LSTM) for correctness checking."""
    emb = params["embedding"]
    x = jnp.take(emb, tokens, axis=0)                # (B, T, E)
    H = params["w_hh"].shape[1]
    B = tokens.shape[0]
    wih_t = params["w_ih"].T
    whh_t = params["w_hh"].T
    bias = params["b_ih"] + params["b_hh"]

    def step(carry, x_t):
        h, c = carry
        gates = x_t @ wih_t + h @ whh_t + bias
        i_g = jax.nn.sigmoid(gates[:, 0:H])
        f_g = jax.nn.sigmoid(gates[:, H:2 * H])
        g_g = jnp.tanh(gates[:, 2 * H:3 * H])
        o_g = jax.nn.sigmoid(gates[:, 3 * H:4 * H])
        c = f_g * c + i_g * g_g
        h = o_g * jnp.tanh(c)
        return (h, c), None

    init = (jnp.zeros((B, H), jnp.float32), jnp.zeros((B, H), jnp.float32))
    (h, _), _ = jax.lax.scan(step, init, jnp.transpose(x, (1, 0, 2)))
    return h


if __name__ == "__main__":
    vocab_size = 26          # synthetic len(char2idx)
    emb_dim = 64
    hidden_dim = 32
    B, T = 2, 8

    key = jax.random.PRNGKey(0)
    k_params, k_tok = jax.random.split(key)
    params = init_params(k_params, vocab_size, emb_dim, hidden_dim)
    tokens = jax.random.randint(k_tok, (B, T), 0, vocab_size + 1, dtype=jnp.int32)

    h = encoder_forward(tokens, params)
    h = jax.block_until_ready(h)

    h_ref = jax.block_until_ready(encoder_forward_ref(tokens, params))
    assert h.shape == (B, hidden_dim)
    np.testing.assert_allclose(np.asarray(h), np.asarray(h_ref), rtol=1e-4, atol=1e-5)

    print("KERNEL_OK")
</pallas_src>

<mosaic_0001>
module attributes {stable_mosaic.version = 11 : i64} {
  func.func @lstm_kernel(%arg0: i32, %arg1: memref<16x64xf32, #tpu.memory_space<vmem>>, %arg2: memref<64x128xf32, #tpu.memory_space<vmem>>, %arg3: memref<32x128xf32, #tpu.memory_space<vmem>>, %arg4: memref<1x128xf32, #tpu.memory_space<vmem>>, %arg5: memref<2x32xf32, #tpu.memory_space<vmem>>, %arg6: memref<16x128xf32, #tpu.memory_space<vmem>>, %arg7: memref<2x32xf32, #tpu.memory_space<vmem>>) attributes {dimension_semantics = [#tpu.dimension_semantics<arbitrary>], iteration_bounds = array<i64: 1>, scalar_prefetch = 0 : i64, scratch_operands = 2 : i64, tpu.core_type = #tpu.core_type<tc>, window_params = [{transform_indices = @transform_0, window_bounds = array<i64: 16, 64>}, {pipeline_mode = #tpu.pipeline_mode<synchronous>, transform_indices = @transform_1, window_bounds = array<i64: 64, 128>}, {pipeline_mode = #tpu.pipeline_mode<synchronous>, transform_indices = @transform_2, window_bounds = array<i64: 32, 128>}, {pipeline_mode = #tpu.pipeline_mode<synchronous>, transform_indices = @transform_3, window_bounds = array<i64: 1, 128>}, {pipeline_mode = #tpu.pipeline_mode<synchronous>, transform_indices = @transform_4, window_bounds = array<i64: 2, 32>}]} {
    %c0_i32 = arith.constant 0 : i32
    %0 = arith.cmpi eq, %arg0, %c0_i32 : i32
    %1 = arith.extui %0 : i1 to i32
    %c0_i32_0 = arith.constant 0 : i32
    %2 = arith.cmpi ne, %1, %c0_i32_0 : i32
    scf.if %2 {
      %cst_51 = arith.constant 0.000000e+00 : f32
      %183 = vector.broadcast %cst_51 : f32 to vector<2x32xf32>
      %c0_52 = arith.constant 0 : index
      %c0_53 = arith.constant 0 : index
      %184 = vector.load %arg5[%c0_52, %c0_53] : memref<2x32xf32, #tpu.memory_space<vmem>>, vector<2x32xf32>
      tpu.vector_store %arg5[%c0_52, %c0_53], %183 {strides = array<i32>} : memref<2x32xf32, #tpu.memory_space<vmem>>, vector<2x32xf32>,
      %cst_54 = arith.constant 0.000000e+00 : f32
      %185 = vector.broadcast %cst_54 : f32 to vector<2x32xf32>
      %c0_55 = arith.constant 0 : index
      %c0_56 = arith.constant 0 : index
      %186 = vector.load %arg7[%c0_55, %c0_56] : memref<2x32xf32, #tpu.memory_space<vmem>>, vector<2x32xf32>
      tpu.vector_store %arg7[%c0_55, %c0_56], %185 {strides = array<i32>} : memref<2x32xf32, #tpu.memory_space<vmem>>, vector<2x32xf32>,
    } else {
    }
    %c0 = arith.constant 0 : index
    %c0_1 = arith.constant 0 : index
    %3 = vector.load %arg1[%c0, %c0_1] : memref<16x64xf32, #tpu.memory_space<vmem>>, vector<16x64xf32>
    %c0_2 = arith.constant 0 : index
    %c0_3 = arith.constant 0 : index
    %4 = vector.load %arg2[%c0_2, %c0_3] : memref<64x128xf32, #tpu.memory_space<vmem>>, vector<64x128xf32>
    %cst = arith.constant dense<0.000000e+00> : vector<16x128xf32>
    %5 = tpu.matmul %3, %4, %cst {dimension_numbers = #tpu.dot_dimension_numbers<[1], [0], [0], [1], [0, 0, 1, 1], [], []>} : vector<16x64xf32>, vector<64x128xf32>, vector<16x128xf32> -> vector<16x128xf32>
    %c0_4 = arith.constant 0 : index
    %c0_5 = arith.constant 0 : index
    %6 = vector.load %arg4[%c0_4, %c0_5] : memref<1x128xf32, #tpu.memory_space<vmem>>, vector<1x128xf32>
    %7 = vector.broadcast %6 : vector<1x128xf32> to vector<16x128xf32>
    %8 = arith.addf %5, %7 : vector<16x128xf32>
    %c0_6 = arith.constant 0 : index
    %c0_7 = arith.constant 0 : index
    %9 = vector.load %arg6[%c0_6, %c0_7] : memref<16x128xf32, #tpu.memory_space<vmem>>, vector<16x128xf32>
    tpu.vector_store %arg6[%c0_6, %c0_7], %8 {strides = array<i32>} : memref<16x128xf32, #tpu.memory_space<vmem>>, vector<16x128xf32>,
    %c0_8 = arith.constant 0 : index
    %c0_9 = arith.constant 0 : index
    %10 = vector.load %arg3[%c0_8, %c0_9] : memref<32x128xf32, #tpu.memory_space<vmem>>, vector<32x128xf32>
    %c0_10 = arith.constant 0 : index
    %c0_11 = arith.constant 0 : index
    %11 = vector.load %arg5[%c0_10, %c0_11] : memref<2x32xf32, #tpu.memory_space<vmem>>, vector<2x32xf32>
    %c0_12 = arith.constant 0 : index
    %c0_13 = arith.constant 0 : index
    %12 = vector.load %arg7[%c0_12, %c0_13] : memref<2x32xf32, #tpu.memory_space<vmem>>, vector<2x32xf32>
    %c0_i32_14 = arith.constant 0 : i32
    %c2_i32 = arith.constant 2 : i32
    %13 = arith.muli %c0_i32_14, %c2_i32 : i32
    %14 = tpu.assume_multiple %13, 2 : i32
    %15 = arith.index_cast %14 : i32 to index
    %c0_15 = arith.constant 0 : index
    %16 = vector.load %arg6[%15, %c0_15] : memref<16x128xf32, #tpu.memory_space<vmem>>, vector<2x128xf32>
    %cst_16 = arith.constant dense<0.000000e+00> : vector<2x128xf32>
    %17 = tpu.matmul %11, %10, %cst_16 {dimension_numbers = #tpu.dot_dimension_numbers<[1], [0], [0], [1], [0, 0, 1, 1], [], []>} : vector<2x32xf32>, vector<32x128xf32>, vector<2x128xf32> -> vector<2x128xf32>
    %18 = arith.addf %16, %17 : vector<2x128xf32>
    %19 = arith.negf %18 : vector<2x128xf32>
    %20 = math.exp %19 : vector<2x128xf32>
    %cst_17 = arith.constant 1.000000e+00 : f32
    %21 = vector.broadcast %cst_17 : f32 to vector<2x128xf32>
    %22 = arith.addf %21, %20 : vector<2x128xf32>
    %23 = arith.divf %21, %22 : vector<2x128xf32>
    %24 = math.tanh %18 : vector<2x128xf32>
    %25 = vector.extract_strided_slice %23 {offsets = [0, 0], sizes = [2, 32], strides = [1, 1]} : vector<2x128xf32> to vector<2x32xf32>
    %26 = vector.extract_strided_slice %23 {offsets = [0, 32], sizes = [2, 32], strides = [1, 1]} : vector<2x128xf32> to vector<2x32xf32>
    %27 = vector.extract_strided_slice %23 {offsets = [0, 96], sizes = [2, 32], strides = [1, 1]} : vector<2x128xf32> to vector<2x32xf32>
    %28 = vector.extract_strided_slice %24 {offsets = [0, 64], sizes = [2, 32], strides = [1, 1]} : vector<2x128xf32> to vector<2x32xf32>
    %29 = arith.mulf %26, %12 : vector<2x32xf32>
    %30 = arith.mulf %25, %28 : vector<2x32xf32>
    %31 = arith.addf %29, %30 : vector<2x32xf32>
    %32 = math.tanh %31 : vector<2x32xf32>
    %33 = arith.mulf %27, %32 : vector<2x32xf32>
    %c1_i32 = arith.constant 1 : i32
    %c2_i32_18 = arith.constant 2 : i32
    %34 = arith.muli %c1_i32, %c2_i32_18 : i32
    %35 = tpu.assume_multiple %34, 2 : i32
    %36 = arith.index_cast %35 : i32 to index
    %c0_19 = arith.constant 0 : index
    %37 = vector.load %arg6[%36, %c0_19] : memref<16x128xf32, #tpu.memory_space<vmem>>, vector<2x128xf32>
    %cst_20 = arith.constant dense<0.000000e+00> : vector<2x128xf32>
    %38 = tpu.matmul %33, %10, %cst_20 {dimension_numbers = #tpu.dot_dimension_numbers<[1], [0], [0], [1], [0, 0, 1, 1], [], []>} : vector<2x32xf32>, vector<32x128xf32>, vector<2x128xf32> -> vector<2x128xf32>
    %39 = arith.addf %37, %38 : vector<2x128xf32>
    %40 = arith.negf %39 : vector<2x128xf32>
    %41 = math.exp %40 : vector<2x128xf32>
    %cst_21 = arith.constant 1.000000e+00 : f32
    %42 = vector.broadcast %cst_21 : f32 to vector<2x128xf32>
    %43 = arith.addf %42, %41 : vector<2x128xf32>
    %44 = arith.divf %42, %43 : vector<2x128xf32>
    %45 = math.tanh %39 : vector<2x128xf32>
    %46 = vector.extract_strided_slice %44 {offsets = [0, 0], sizes = [2, 32], strides = [1, 1]} : vector<2x128xf32> to vector<2x32xf32>
    %47 = vector.extract_strided_slice %44 {offsets = [0, 32], sizes = [2, 32], strides = [1, 1]} : vector<2x128xf32> to vector<2x32xf32>
    %48 = vector.extract_strided_slice %44 {offsets = [0, 96], sizes = [2, 32], strides = [1, 1]} : vector<2x128xf32> to vector<2x32xf32>
    %49 = vector.extract_strided_slice %45 {offsets = [0, 64], sizes = [2, 32], strides = [1, 1]} : vector<2x128xf32> to vector<2x32xf32>
    %50 = arith.mulf %47, %31 : vector<2x32xf32>
    %51 = arith.mulf %46, %49 : vector<2x32xf32>
    %52 = arith.addf %50, %51 : vector<2x32xf32>
    %53 = math.tanh %52 : vector<2x32xf32>
    %54 = arith.mulf %48, %53 : vector<2x32xf32>
    %c2_i32_22 = arith.constant 2 : i32
    %c2_i32_23 = arith.constant 2 : i32
    %55 = arith.muli %c2_i32_22, %c2_i32_23 : i32
    %56 = tpu.assume_multiple %55, 2 : i32
    %57 = arith.index_cast %56 : i32 to index
    %c0_24 = arith.constant 0 : index
    %58 = vector.load %arg6[%57, %c0_24] : memref<16x128xf32, #tpu.memory_space<vmem>>, vector<2x128xf32>
    %cst_25 = arith.constant dense<0.000000e+00> : vector<2x128xf32>
    %59 = tpu.matmul %54, %10, %cst_25 {dimension_numbers = #tpu.dot_dimension_numbers<[1], [0], [0], [1], [0, 0, 1, 1], [], []>} : vector<2x32xf32>, vector<32x128xf32>, vector<2x128xf32> -> vector<2x128xf32>
    %60 = arith.addf %58, %59 : vector<2x128xf32>
    %61 = arith.negf %60 : vector<2x128xf32>
    %62 = math.exp %61 : vector<2x128xf32>
    %cst_26 = arith.constant 1.000000e+00 : f32
    %63 = vector.broadcast %cst_26 : f32 to vector<2x128xf32>
    %64 = arith.addf %63, %62 : vector<2x128xf32>
    %65 = arith.divf %63, %64 : vector<2x128xf32>
    %66 = math.tanh %60 : vector<2x128xf32>
    %67 = vector.extract_strided_slice %65 {offsets = [0, 0], sizes = [2, 32], strides = [1, 1]} : vector<2x128xf32> to vector<2x32xf32>
    %68 = vector.extract_strided_slice %65 {offsets = [0, 32], sizes = [2, 32], strides = [1, 1]} : vector<2x128xf32> to vector<2x32xf32>
    %69 = vector.extract_strided_slice %65 {offsets = [0, 96], sizes = [2, 32], strides = [1, 1]} : vector<2x128xf32> to vector<2x32xf32>
    %70 = vector.extract_strided_slice %66 {offsets = [0, 64], sizes = [2, 32], strides = [1, 1]} : vector<2x128xf32> to vector<2x32xf32>
    %71 = arith.mulf %68, %52 : vector<2x32xf32>
    %72 = arith.mulf %67, %70 : vector<2x32xf32>
    %73 = arith.addf %71, %72 : vector<2x32xf32>
    %74 = math.tanh %73 : vector<2x32xf32>
    %75 = arith.mulf %69, %74 : vector<2x32xf32>
    %c3_i32 = arith.constant 3 : i32
    %c2_i32_27 = arith.constant 2 : i32
    %76 = arith.muli %c3_i32, %c2_i32_27 : i32
    %77 = tpu.assume_multiple %76, 2 : i32
    %78 = arith.index_cast %77 : i32 to index
    %c0_28 = arith.constant 0 : index
    %79 = vector.load %arg6[%78, %c0_28] : memref<16x128xf32, #tpu.memory_space<vmem>>, vector<2x128xf32>
    %cst_29 = arith.constant dense<0.000000e+00> : vector<2x128xf32>
    %80 = tpu.matmul %75, %10, %cst_29 {dimension_numbers = #tpu.dot_dimension_numbers<[1], [0], [0], [1], [0, 0, 1, 1], [], []>} : vector<2x32xf32>, vector<32x128xf32>, vector<2x128xf32> -> vector<2x128xf32>
    %81 = arith.addf %79, %80 : vector<2x128xf32>
    %82 = arith.negf %81 : vector<2x128xf32>
    %83 = math.exp %82 : vector<2x128xf32>
    %cst_30 = arith.constant 1.000000e+00 : f32
    %84 = vector.broadcast %cst_30 : f32 to vector<2x128xf32>
    %85 = arith.addf %84, %83 : vector<2x128xf32>
    %86 = arith.divf %84, %85 : vector<2x128xf32>
    %87 = math.tanh %81 : vector<2x128xf32>
    %88 = vector.extract_strided_slice %86 {offsets = [0, 0], sizes = [2, 32], strides = [1, 1]} : vector<2x128xf32> to vector<2x32xf32>
    %89 = vector.extract_strided_slice %86 {offsets = [0, 32], sizes = [2, 32], strides = [1, 1]} : vector<2x128xf32> to vector<2x32xf32>
    %90 = vector.extract_strided_slice %86 {offsets = [0, 96], sizes = [2, 32], strides = [1, 1]} : vector<2x128xf32> to vector<2x32xf32>
    %91 = vector.extract_strided_slice %87 {offsets = [0, 64], sizes = [2, 32], strides = [1, 1]} : vector<2x128xf32> to vector<2x32xf32>
    %92 = arith.mulf %89, %73 : vector<2x32xf32>
    %93 = arith.mulf %88, %91 : vector<2x32xf32>
    %94 = arith.addf %92, %93 : vector<2x32xf32>
    %95 = math.tanh %94 : vector<2x32xf32>
    %96 = arith.mulf %90, %95 : vector<2x32xf32>
    %c4_i32 = arith.constant 4 : i32
    %c2_i32_31 = arith.constant 2 : i32
    %97 = arith.muli %c4_i32, %c2_i32_31 : i32
    %98 = tpu.assume_multiple %97, 2 : i32
    %99 = arith.index_cast %98 : i32 to index
    %c0_32 = arith.constant 0 : index
    %100 = vector.load %arg6[%99, %c0_32] : memref<16x128xf32, #tpu.memory_space<vmem>>, vector<2x128xf32>
    %cst_33 = arith.constant dense<0.000000e+00> : vector<2x128xf32>
    %101 = tpu.matmul %96, %10, %cst_33 {dimension_numbers = #tpu.dot_dimension_numbers<[1], [0], [0], [1], [0, 0, 1, 1], [], []>} : vector<2x32xf32>, vector<32x128xf32>, vector<2x128xf32> -> vector<2x128xf32>
    %102 = arith.addf %100, %101 : vector<2x128xf32>
    %103 = arith.negf %102 : vector<2x128xf32>
    %104 = math.exp %103 : vector<2x128xf32>
    %cst_34 = arith.constant 1.000000e+00 : f32
    %105 = vector.broadcast %cst_34 : f32 to vector<2x128xf32>
    %106 = arith.addf %105, %104 : vector<2x128xf32>
    %107 = arith.divf %105, %106 : vector<2x128xf32>
    %108 = math.tanh %102 : vector<2x128xf32>
    %109 = vector.extract_strided_slice %107 {offsets = [0, 0], sizes = [2, 32], strides = [1, 1]} : vector<2x128xf32> to vector<2x32xf32>
    %110 = vector.extract_strided_slice %107 {offsets = [0, 32], sizes = [2, 32], strides = [1, 1]} : vector<2x128xf32> to vector<2x32xf32>
    %111 = vector.extract_strided_slice %107 {offsets = [0, 96], sizes = [2, 32], strides = [1, 1]} : vector<2x128xf32> to vector<2x32xf32>
    %112 = vector.extract_strided_slice %108 {offsets = [0, 64], sizes = [2, 32], strides = [1, 1]} : vector<2x128xf32> to vector<2x32xf32>
    %113 = arith.mulf %110, %94 : vector<2x32xf32>
    %114 = arith.mulf %109, %112 : vector<2x32xf32>
    %115 = arith.addf %113, %114 : vector<2x32xf32>
    %116 = math.tanh %115 : vector<2x32xf32>
    %117 = arith.mulf %111, %116 : vector<2x32xf32>
    %c5_i32 = arith.constant 5 : i32
    %c2_i32_35 = arith.constant 2 : i32
    %118 = arith.muli %c5_i32, %c2_i32_35 : i32
    %119 = tpu.assume_multiple %118, 2 : i32
    %120 = arith.index_cast %119 : i32 to index
    %c0_36 = arith.constant 0 : index
    %121 = vector.load %arg6[%120, %c0_36] : memref<16x128xf32, #tpu.memory_space<vmem>>, vector<2x128xf32>
    %cst_37 = arith.constant dense<0.000000e+00> : vector<2x128xf32>
    %122 = tpu.matmul %117, %10, %cst_37 {dimension_numbers = #tpu.dot_dimension_numbers<[1], [0], [0], [1], [0, 0, 1, 1], [], []>} : vector<2x32xf32>, vector<32x128xf32>, vector<2x128xf32> -> vector<2x128xf32>
    %123 = arith.addf %121, %122 : vector<2x128xf32>
    %124 = arith.negf %123 : vector<2x128xf32>
    %125 = math.exp %124 : vector<2x128xf32>
    %cst_38 = arith.constant 1.000000e+00 : f32
    %126 = vector.broadcast %cst_38 : f32 to vector<2x128xf32>
    %127 = arith.addf %126, %125 : vector<2x128xf32>
    %128 = arith.divf %126, %127 : vector<2x128xf32>
    %129 = math.tanh %123 : vector<2x128xf32>
    %130 = vector.extract_strided_slice %128 {offsets = [0, 0], sizes = [2, 32], strides = [1, 1]} : vector<2x128xf32> to vector<2x32xf32>
    %131 = vector.extract_strided_slice %128 {offsets = [0, 32], sizes = [2, 32], strides = [1, 1]} : vector<2x128xf32> to vector<2x32xf32>
    %132 = vector.extract_strided_slice %128 {offsets = [0, 96], sizes = [2, 32], strides = [1, 1]} : vector<2x128xf32> to vector<2x32xf32>
    %133 = vector.extract_strided_slice %129 {offsets = [0, 64], sizes = [2, 32], strides = [1, 1]} : vector<2x128xf32> to vector<2x32xf32>
    %134 = arith.mulf %131, %115 : vector<2x32xf32>
    %135 = arith.mulf %130, %133 : vector<2x32xf32>
    %136 = arith.addf %134, %135 : vector<2x32xf32>
    %137 = math.tanh %136 : vector<2x32xf32>
    %138 = arith.mulf %132, %137 : vector<2x32xf32>
    %c6_i32 = arith.constant 6 : i32
    %c2_i32_39 = arith.constant 2 : i32
    %139 = arith.muli %c6_i32, %c2_i32_39 : i32
    %140 = tpu.assume_multiple %139, 2 : i32
    %141 = arith.index_cast %140 : i32 to index
    %c0_40 = arith.constant 0 : index
    %142 = vector.load %arg6[%141, %c0_40] : memref<16x128xf32, #tpu.memory_space<vmem>>, vector<2x128xf32>
    %cst_41 = arith.constant dense<0.000000e+00> : vector<2x128xf32>
    %143 = tpu.matmul %138, %10, %cst_41 {dimension_numbers = #tpu.dot_dimension_numbers<[1], [0], [0], [1], [0, 0, 1, 1], [], []>} : vector<2x32xf32>, vector<32x128xf32>, vector<2x128xf32> -> vector<2x128xf32>
    %144 = arith.addf %142, %143 : vector<2x128xf32>
    %145 = arith.negf %144 : vector<2x128xf32>
    %146 = math.exp %145 : vector<2x128xf32>
    %cst_42 = arith.constant 1.000000e+00 : f32
    %147 = vector.broadcast %cst_42 : f32 to vector<2x128xf32>
    %148 = arith.addf %147, %146 : vector<2x128xf32>
    %149 = arith.divf %147, %148 : vector<2x128xf32>
    %150 = math.tanh %144 : vector<2x128xf32>
    %151 = vector.extract_strided_slice %149 {offsets = [0, 0], sizes = [2, 32], strides = [1, 1]} : vector<2x128xf32> to vector<2x32xf32>
    %152 = vector.extract_strided_slice %149 {offsets = [0, 32], sizes = [2, 32], strides = [1, 1]} : vector<2x128xf32> to vector<2x32xf32>
    %153 = vector.extract_strided_slice %149 {offsets = [0, 96], sizes = [2, 32], strides = [1, 1]} : vector<2x128xf32> to vector<2x32xf32>
    %154 = vector.extract_strided_slice %150 {offsets = [0, 64], sizes = [2, 32], strides = [1, 1]} : vector<2x128xf32> to vector<2x32xf32>
    %155 = arith.mulf %152, %136 : vector<2x32xf32>
    %156 = arith.mulf %151, %154 : vector<2x32xf32>
    %157 = arith.addf %155, %156 : vector<2x32xf32>
    %158 = math.tanh %157 : vector<2x32xf32>
    %159 = arith.mulf %153, %158 : vector<2x32xf32>
    %c7_i32 = arith.constant 7 : i32
    %c2_i32_43 = arith.constant 2 : i32
    %160 = arith.muli %c7_i32, %c2_i32_43 : i32
    %161 = tpu.assume_multiple %160, 2 : i32
    %162 = arith.index_cast %161 : i32 to index
    %c0_44 = arith.constant 0 : index
    %163 = vector.load %arg6[%162, %c0_44] : memref<16x128xf32, #tpu.memory_space<vmem>>, vector<2x128xf32>
    %cst_45 = arith.constant dense<0.000000e+00> : vector<2x128xf32>
    %164 = tpu.matmul %159, %10, %cst_45 {dimension_numbers = #tpu.dot_dimension_numbers<[1], [0], [0], [1], [0, 0, 1, 1], [], []>} : vector<2x32xf32>, vector<32x128xf32>, vector<2x128xf32> -> vector<2x128xf32>
    %165 = arith.addf %163, %164 : vector<2x128xf32>
    %166 = arith.negf %165 : vector<2x128xf32>
    %167 = math.exp %166 : vector<2x128xf32>
    %cst_46 = arith.constant 1.000000e+00 : f32
    %168 = vector.broadcast %cst_46 : f32 to vector<2x128xf32>
    %169 = arith.addf %168, %167 : vector<2x128xf32>
    %170 = arith.divf %168, %169 : vector<2x128xf32>
    %171 = math.tanh %165 : vector<2x128xf32>
    %172 = vector.extract_strided_slice %170 {offsets = [0, 0], sizes = [2, 32], strides = [1, 1]} : vector<2x128xf32> to vector<2x32xf32>
    %173 = vector.extract_strided_slice %170 {offsets = [0, 32], sizes = [2, 32], strides = [1, 1]} : vector<2x128xf32> to vector<2x32xf32>
    %174 = vector.extract_strided_slice %170 {offsets = [0, 96], sizes = [2, 32], strides = [1, 1]} : vector<2x128xf32> to vector<2x32xf32>
    %175 = vector.extract_strided_slice %171 {offsets = [0, 64], sizes = [2, 32], strides = [1, 1]} : vector<2x128xf32> to vector<2x32xf32>
    %176 = arith.mulf %173, %157 : vector<2x32xf32>
    %177 = arith.mulf %172, %175 : vector<2x32xf32>
    %178 = arith.addf %176, %177 : vector<2x32xf32>
    %179 = math.tanh %178 : vector<2x32xf32>
    %180 = arith.mulf %174, %179 : vector<2x32xf32>
    %c8_i32 = arith.constant 8 : i32
    %c0_47 = arith.constant 0 : index
    %c0_48 = arith.constant 0 : index
    %181 = vector.load %arg5[%c0_47, %c0_48] : memref<2x32xf32, #tpu.memory_space<vmem>>, vector<2x32xf32>
    tpu.vector_store %arg5[%c0_47, %c0_48], %180 {strides = array<i32>} : memref<2x32xf32, #tpu.memory_space<vmem>>, vector<2x32xf32>,
    %c0_49 = arith.constant 0 : index
    %c0_50 = arith.constant 0 : index
    %182 = vector.load %arg7[%c0_49, %c0_50] : memref<2x32xf32, #tpu.memory_space<vmem>>, vector<2x32xf32>
    tpu.vector_store %arg7[%c0_49, %c0_50], %178 {strides = array<i32>} : memref<2x32xf32, #tpu.memory_space<vmem>>, vector<2x32xf32>,
    return
  }
  func.func @transform_0(%arg0: i32) -> (i32, i32) {
    %c0_i32 = arith.constant 0 : i32
    %c0_i32_0 = arith.constant 0 : i32
    return %arg0, %c0_i32 : i32, i32
  }
  func.func @transform_1(%arg0: i32) -> (i32, i32) {
    %c0_i32 = arith.constant 0 : i32
    %c0_i32_0 = arith.constant 0 : i32
    %c0_i32_1 = arith.constant 0 : i32
    return %c0_i32, %c0_i32_0 : i32, i32
  }
  func.func @transform_2(%arg0: i32) -> (i32, i32) {
    %c0_i32 = arith.constant 0 : i32
    %c0_i32_0 = arith.constant 0 : i32
    %c0_i32_1 = arith.constant 0 : i32
    return %c0_i32, %c0_i32_0 : i32, i32
  }
  func.func @transform_3(%arg0: i32) -> (i32, i32) {
    %c0_i32 = arith.constant 0 : i32
    %c0_i32_0 = arith.constant 0 : i32
    %c0_i32_1 = arith.constant 0 : i32
    return %c0_i32, %c0_i32_0 : i32, i32
  }
  func.func @transform_4(%arg0: i32) -> (i32, i32) {
    %c0_i32 = arith.constant 0 : i32
    %c0_i32_0 = arith.constant 0 : i32
    %c0_i32_1 = arith.constant 0 : i32
    return %c0_i32, %c0_i32_0 : i32, i32
  }
}

</mosaic_0001>

<llo_original>
// kernel: encoder_forward.1
$region0: #{encoder_forward.1}
  #allocation0 [shape = 'u32[]', space=smem, size = 0x4, offset = 0x4, fixed_abs, tag = 'smem constant byte address 0x4 - core index']
  #allocation1 [shape = 'u32[144,128]{1,0:T(1,128)}', space=vmem, size = 0x12000, scoped, tag = 'internal scratch']
  #allocation2 [shape = 'f32[16,128]{1,0:T(8,128)}', space=vmem, size = 0x2000, scoped, tag = 'scratch operand']
  #allocation3 [shape = 'f32[2,32]{1,0:T(2,128)}', space=vmem, size = 0x400, scoped, tag = 'scratch operand']
  %s0 = inlined_call_operand.vmem [shape: f32[16,64], index: 0, kind: input, shape index: {}]
  %s1 = inlined_call_operand.vmem [shape: f32[64,128], index: 1, kind: input, shape index: {}]
  %s2 = inlined_call_operand.vmem [shape: f32[32,128], index: 2, kind: input, shape index: {}]
  %s3 = inlined_call_operand.vmem [shape: f32[1,128], index: 3, kind: input, shape index: {}]
  %s4 = inlined_call_operand.hbm [shape: f32[2,32], index: 4, kind: output, shape index: {}]
  %s5 = sld [smem:[#allocation0]]
  $region30: #{encoder_forward.1} parent=0
    _
  %s7 = ssub.s32 1, %s5
  %s8 = scalar_select 0, %s7, %s5
  $region1: #{encoder_forward.1} parent=0
    #allocation4 [shape = 'u8[1024]{0}', space=vmem, size = 0x400, scoped, tag = 'output window, operand 0, single buffered']
    #allocation5 [shape = 's32[1]{0}', space=sflag, size = 0x4, scoped, tag = 'scoped memory for encoder_forward.1']
    %9 = vsyncpa [#allocation5], 0
    // Predicated region
    $region2: #{encoder_forward.1} parent=1 // pred_check
      _
    $region3: #{encoder_forward.1} parent=1 // pred_check_branch
      %11 = sbr.rel (0) target = $region5
    $region4: #{encoder_forward.1} parent=1 // pred_region
      _
    $region5: #{encoder_forward.1} parent=1 // pred_fallthru
      _
    // Predicated region
    $region6: #{encoder_forward.1} parent=1 // pred_check
      _
    $region7: #{encoder_forward.1} parent=1 // pred_check_branch
      %13 = sbr.rel (0) target = $region9
    $region8: #{encoder_forward.1} parent=1 // pred_region
      _
    $region9: #{encoder_forward.1} parent=1 // pred_fallthru
      _
    // Predicated region
    $region10: #{encoder_forward.1} parent=1 // pred_check
      _
    $region11: #{encoder_forward.1} parent=1 // pred_check_branch
      %15 = sbr.rel (0) target = $region13
    $region12: #{encoder_forward.1} parent=1 // pred_region
      _
    $region13: #{encoder_forward.1} parent=1 // pred_fallthru
      _
    // Predicated region
    $region14: #{encoder_forward.1} parent=1 // pred_check
      _
    $region15: #{encoder_forward.1} parent=1 // pred_check_branch
      %17 = sbr.rel (0) target = $region17
    $region16: #{encoder_forward.1} parent=1 // pred_region
      _
    $region17: #{encoder_forward.1} parent=1 // pred_fallthru
      _
    %p18 = scmp.eq.s32.totalorder 0, 0
    // Predicated region
    $region18: #{encoder_forward.1} parent=1 // pred_check
      %p19 = pneg %p18
    $region19: #{encoder_forward.1} parent=1 // pred_check_branch
      %21 = sbr.rel (%p19) target = $region21
    $region20: #{encoder_forward.1} parent=1 // pred_region
      %vm22 = vcmask 254976
      %23 = vst.msk [vmem:[#allocation4] sm:$0x3] %vm22, 0.0
      %24 = vst.msk [vmem:[#allocation3] sm:$0x3] %vm22, 0.0
    $region21: #{encoder_forward.1} parent=1 // pred_fallthru
      _
    %v25 = vld [vmem:[%s0] sm:$0xff]
    %v26 = vld [vmem:[%s0 + $0x8] sm:$0xff]
    %v27 = vld [vmem:[%s1] sm:$0xff]
    %v28 = vld [vmem:[%s1 + $0x8] sm:$0xff]
    %v29 = vld [vmem:[%s1 + $0x10] sm:$0xff]
    %v30 = vld [vmem:[%s1 + $0x18] sm:$0xff]
    %v31 = vld [vmem:[%s1 + $0x20] sm:$0xff]
    %v32 = vld [vmem:[%s1 + $0x28] sm:$0xff]
    %v33 = vld [vmem:[%s1 + $0x30] sm:$0xff]
    %v34 = vld [vmem:[%s1 + $0x38] sm:$0xff]
    %v35 = vld [vmem:[%s3] sm:$0x1]
    %v37 = vlaneseq
    %v38 = vshrl.u32 %v37, 7
    %v39 = vsub.s32 0, %v38
    %v40 = vrot.slane %v35, %v39
    %vm42 = vcmask 523264
    %v44 = vsel %vm42, %v25, 0
    %v47 = vsel %vm42, %v26, 0
    %49 = vmatprep.subr.mxu0 0.0
    %50 = vmatpush1.msra.mxu0 %v27
    %51 = vmatprep.subr.mxu0 0.0
    %52 = vmatpush1.msra.mxu0 %v28
    %53 = vmatprep.subr.mxu0 0.0
    %54 = vmatpush1.msra.mxu0 %v29
    %55 = vmatprep.subr.mxu0 0.0
    %56 = vmatpush1.msra.mxu0 %v30
    %57 = vmatprep.subr.mxu0 0.0
    %58 = vmatpush1.msra.mxu0 %v31
    %59 = vmatprep.subr.mxu0 0.0
    %60 = vmatpush1.msra.mxu0 %v32
    %61 = vmatprep.subr.mxu0 0.0
    %62 = vmatpush1.msra.mxu0 %v33
    %63 = vmatprep.subr.mxu0 0.0
    %64 = vmatpush1.msra.mxu0 %v34
    %65 = vmatprep.subr.mxu0 0.0
    %66 = vmatpush1.msra.mxu0 0.0
    %67 = vmatprep.subr.mxu0 0.0
    %68 = vmatpush1.msra.mxu0 0.0
    %69 = vmatprep.subr.mxu0 0.0
    %70 = vmatpush1.msra.mxu0 0.0
    %71 = vmatprep.subr.mxu0 0.0
    %72 = vmatpush1.msra.mxu0 0.0
    %73 = vmatprep.subr.mxu0 0.0
    %74 = vmatpush1.msra.mxu0 0.0
    %75 = vmatprep.subr.mxu0 0.0
    %76 = vmatpush1.msra.mxu0 0.0
    %77 = vmatprep.subr.mxu0 0.0
    %78 = vmatpush1.msra.mxu0 0.0
    %79 = vmatprep.subr.mxu0 0.0
    %80 = vmatpush1.msra.mxu0 0.0
    %81 = vmatprep.subr.mxu0 0.0
    %82 = vmatpush1.msra.mxu0 0.0
    %83 = vmatprep.subr.mxu0 0.0
    %84 = vmatpush1.msra.mxu0 0.0
    %85 = vmatprep.subr.mxu0 0.0
    %86 = vmatpush1.msra.mxu0 0.0
    %87 = vmatprep.subr.mxu0 0.0
    %88 = vmatpush1.msra.mxu0 0.0
    %89 = vmatprep.subr.mxu0 0.0
    %90 = vmatpush1.msra.mxu0 0.0
    %91 = vmatprep.subr.mxu0 0.0
    %92 = vmatpush1.msra.mxu0 0.0
    %93 = vmatprep.subr.mxu0 0.0
    %94 = vmatpush1.msra.mxu0 0.0
    %95 = vmatprep.subr.mxu0 0.0
    %96 = vmatpush1.msra.mxu0 0.0
    %97 = vmatprep.subr.mxu0 0.0
    %98 = vmatpush1.msra.mxu0 0.0
    %99 = vmatprep.subr.mxu0 0.0
    %100 = vmatpush1.msra.mxu0 0.0
    %101 = vmatprep.subr.mxu0 0.0
    %102 = vmatpush1.msra.mxu0 0.0
    %103 = vmatprep.subr.mxu0 0.0
    %104 = vmatpush1.msra.mxu0 0.0
    %105 = vmatprep.subr.mxu0 0.0
    %106 = vmatpush1.msra.mxu0 0.0
    %107 = vmatprep.subr.mxu0 0.0
    %108 = vmatpush1.msra.mxu0 0.0
    %109 = vmatprep.subr.mxu0 0.0
    %110 = vmatpush1.msra.mxu0 0.0
    %111 = vmatprep.subr.mxu0 0.0
    %112 = vmatpush1.msra.mxu0 0.0
    %113 = vmatprep.mubr.f32.mxu0 0.0
    %114 = vmatmul.mubr.f32.gmra.mrb[0].mxu0 %v44
    %v115 = vpop.f32.mrb[0].mxu0
    %v116 = vadd.f32 %v40, %v115
    %v117 = vpop.f32.mrb[0].mxu0
    %118 = vmatprep.mubr.f32.mxu0 0.0
    %119 = vmatmul.mubr.f32.gmra.mrb[0].mxu0 %v47
    %v120 = vpop.f32.mrb[0].mxu0
    %v121 = vadd.f32 %v40, %v120
    %v122 = vpop.f32.mrb[0].mxu0
    %123 = vdwg.mxu0
    %124 = vst [vmem:[#allocation2] sm:$0xff] %v116
    %125 = vst [vmem:[#allocation2 + $0x8] sm:$0xff] %v121
    %v126 = vld [vmem:[%s2] sm:$0xff]
    %v127 = vld [vmem:[%s2 + $0x8] sm:$0xff]
    %v128 = vld [vmem:[%s2 + $0x10] sm:$0xff]
    %v129 = vld [vmem:[%s2 + $0x18] sm:$0xff]
    %v130 = vld [vmem:[#allocation4] sm:$0x3]
    %v131 = vld [vmem:[#allocation3] sm:$0x3]
    %v132 = vld [vmem:[#allocation2] sm:$0x3]
    %vm133 = vcmask 261120
    %v135 = vsel %vm133, %v130, 0
    %137 = vmatprep.subr.mxu0 0.0
    %138 = vmatpush1.msra.mxu0 %v126
    %139 = vmatprep.subr.mxu0 0.0
    %140 = vmatpush1.msra.mxu0 %v127
    %141 = vmatprep.subr.mxu0 0.0
    %142 = vmatpush1.msra.mxu0 %v128
    %143 = vmatprep.subr.mxu0 0.0
    %144 = vmatpush1.msra.mxu0 %v129
    %145 = vmatprep.subr.mxu0 0.0
    %146 = vmatpush1.msra.mxu0 0.0
    %147 = vmatprep.subr.mxu0 0.0
    %148 = vmatpush1.msra.mxu0 0.0
    %149 = vmatprep.subr.mxu0 0.0
    %150 = vmatpush1.msra.mxu0 0.0
    %151 = vmatprep.subr.mxu0 0.0
    %152 = vmatpush1.msra.mxu0 0.0
    %153 = vmatprep.subr.mxu0 0.0
    %154 = vmatpush1.msra.mxu0 0.0
    %155 = vmatprep.subr.mxu0 0.0
    %156 = vmatpush1.msra.mxu0 0.0
    %157 = vmatprep.subr.mxu0 0.0
    %158 = vmatpush1.msra.mxu0 0.0
    %159 = vmatprep.subr.mxu0 0.0
    %160 = vmatpush1.msra.mxu0 0.0
    %161 = vmatprep.subr.mxu0 0.0
    %162 = vmatpush1.msra.mxu0 0.0
    %163 = vmatprep.subr.mxu0 0.0
    %164 = vmatpush1.msra.mxu0 0.0
    %165 = vmatprep.subr.mxu0 0.0
    %166 = vmatpush1.msra.mxu0 0.0
    %167 = vmatprep.subr.mxu0 0.0
    %168 = vmatpush1.msra.mxu0 0.0
    %169 = vmatprep.subr.mxu0 0.0
    %170 = vmatpush1.msra.mxu0 0.0
    %171 = vmatprep.subr.mxu0 0.0
    %172 = vmatpush1.msra.mxu0 0.0
    %173 = vmatprep.subr.mxu0 0.0
    %174 = vmatpush1.msra.mxu0 0.0
    %175 = vmatprep.subr.mxu0 0.0
    %176 = vmatpush1.msra.mxu0 0.0
    %177 = vmatprep.subr.mxu0 0.0
    %178 = vmatpush1.msra.mxu0 0.0
    %179 = vmatprep.subr.mxu0 0.0
    %180 = vmatpush1.msra.mxu0 0.0
    %181 = vmatprep.subr.mxu0 0.0
    %182 = vmatpush1.msra.mxu0 0.0
    %183 = vmatprep.subr.mxu0 0.0
    %184 = vmatpush1.msra.mxu0 0.0
    %185 = vmatprep.subr.mxu0 0.0
    %186 = vmatpush1.msra.mxu0 0.0
    %187 = vmatprep.subr.mxu0 0.0
    %188 = vmatpush1.msra.mxu0 0.0
    %189 = vmatprep.subr.mxu0 0.0
    %190 = vmatpush1.msra.mxu0 0.0
    %191 = vmatprep.subr.mxu0 0.0
    %192 = vmatpush1.msra.mxu0 0.0
    %193 = vmatprep.subr.mxu0 0.0
    %194 = vmatpush1.msra.mxu0 0.0
    %195 = vmatprep.subr.mxu0 0.0
    %196 = vmatpush1.msra.mxu0 0.0
    %197 = vmatprep.subr.mxu0 0.0
    %198 = vmatpush1.msra.mxu0 0.0
    %199 = vmatprep.subr.mxu0 0.0
    %200 = vmatpush1.msra.mxu0 0.0
    %201 = vmatprep.mubr.f32.mxu0 0.0
    %202 = vmatmul.mubr.f32.gmra.mrb[0].mxu0 %v135
    %v203 = vpop.f32.mrb[0].mxu0
    %v204 = vadd.f32 0.0, %v203
    %v205 = vpop.f32.mrb[0].mxu0
    %206 = vdwg.mxu0
    %v207 = vadd.f32 %v132, %v204
    %v208 = vxor.u32 %v207, 2147483648
    %v209 = vmul.f32 %v208, 1.442695
    %v210 = vpow.pop %v209
    %v211 = vadd.f32 %v210, 1.0
    %v212 = vrcp.pop %v211
    %v213 = vmul.f32 1.0, %v212
    %v214 = vtanh.pop %v207
    %216 = vrot.lane.b32.xlu0 %v131, 32
    %v217 = vpop.permute.xlu0 %216
    %v219 = vmul.f32 %v213, %v217
    %221 = vrot.lane.b32.xlu0 %v214, 64
    %v222 = vpop.permute.xlu0 %221
    %v224 = vmul.f32 %v213, %v222
    %226 = vrot.lane.b32.xlu0 %v224, 32
    %v227 = vpop.permute.xlu0 %226
    %v229 = vadd.f32 %v219, %v227
    %v230 = vtanh.pop %v229
    %232 = vrot.lane.b32.xlu0 %v230, 64
    %v233 = vpop.permute.xlu0 %232
    %v235 = vmul.f32 %v213, %v233
    %s236 = scalar_lea.vmem [#allocation2], 2
    %v237 = vld [vmem:[%s236] sm:$0x3]
    %239 = vrot.lane.b32.xlu0 %v235, 32
    %v240 = vpop.permute.xlu0 %239
    %v241 = vsel %vm133, %v240, 0
    %243 = vmatprep.subr.mxu0 0.0
    %244 = vmatpush1.msra.mxu0 %v126
    %245 = vmatprep.subr.mxu0 0.0
    %246 = vmatpush1.msra.mxu0 %v127
    %247 = vmatprep.subr.mxu0 0.0
    %248 = vmatpush1.msra.mxu0 %v128
    %249 = vmatprep.subr.mxu0 0.0
    %250 = vmatpush1.msra.mxu0 %v129
    %251 = vmatprep.subr.mxu0 0.0
    %252 = vmatpush1.msra.mxu0 0.0
    %253 = vmatprep.subr.mxu0 0.0
    %254 = vmatpush1.msra.mxu0 0.0
    %255 = vmatprep.subr.mxu0 0.0
    %256 = vmatpush1.msra.mxu0 0.0
    %257 = vmatprep.subr.mxu0 0.0
    %258 = vmatpush1.msra.mxu0 0.0
    %259 = vmatprep.subr.mxu0 0.0
    %260 = vmatpush1.msra.mxu0 0.0
    %261 = vmatprep.subr.mxu0 0.0
    %262 = vmatpush1.msra.mxu0 0.0
    %263 = vmatprep.subr.mxu0 0.0
    %264 = vmatpush1.msra.mxu0 0.0
    %265 = vmatprep.subr.mxu0 0.0
    %266 = vmatpush1.msra.mxu0 0.0
    %267 = vmatprep.subr.mxu0 0.0
    %268 = vmatpush1.msra.mxu0 0.0
    %269 = vmatprep.subr.mxu0 0.0
    %270 = vmatpush1.msra.mxu0 0.0
    %271 = vmatprep.subr.mxu0 0.0
    %272 = vmatpush1.msra.mxu0 0.0
    %273 = vmatprep.subr.mxu0 0.0
    %274 = vmatpush1.msra.mxu0 0.0
    %275 = vmatprep.subr.mxu0 0.0
    %276 = vmatpush1.msra.mxu0 0.0
    %277 = vmatprep.subr.mxu0 0.0
    %278 = vmatpush1.msra.mxu0 0.0
    %279 = vmatprep.subr.mxu0 0.0
    %280 = vmatpush1.msra.mxu0 0.0
    %281 = vmatprep.subr.mxu0 0.0
    %282 = vmatpush1.msra.mxu0 0.0
    %283 = vmatprep.subr.mxu0 0.0
    %284 = vmatpush1.msra.mxu0 0.0
    %285 = vmatprep.subr.mxu0 0.0
    %286 = vmatpush1.msra.mxu0 0.0
    %287 = vmatprep.subr.mxu0 0.0
    %288 = vmatpush1.msra.mxu0 0.0
    %289 = vmatprep.subr.mxu0 0.0
    %290 = vmatpush1.msra.mxu0 0.0
    %291 = vmatprep.subr.mxu0 0.0
    %292 = vmatpush1.msra.mxu0 0.0
    %293 = vmatprep.subr.mxu0 0.0
    %294 = vmatpush1.msra.mxu0 0.0
    %295 = vmatprep.subr.mxu0 0.0
    %296 = vmatpush1.msra.mxu0 0.0
    %297 = vmatprep.subr.mxu0 0.0
    %298 = vmatpush1.msra.mxu0 0.0
    %299 = vmatprep.subr.mxu0 0.0
    %300 = vmatpush1.msra.mxu0 0.0
    %301 = vmatprep.subr.mxu0 0.0
    %302 = vmatpush1.msra.mxu0 0.0
    %303 = vmatprep.subr.mxu0 0.0
    %304 = vmatpush1.msra.mxu0 0.0
    %305 = vmatprep.subr.mxu0 0.0
    %306 = vmatpush1.msra.mxu0 0.0
    %307 = vmatprep.mubr.f32.mxu0 0.0
    %308 = vmatmul.mubr.f32.gmra.mrb[0].mxu0 %v241
    %v309 = vpop.f32.mrb[0].mxu0
    %v310 = vadd.f32 0.0, %v309
    %v311 = vpop.f32.mrb[0].mxu0
    %312 = vdwg.mxu0
    %v313 = vadd.f32 %v237, %v310
    %v314 = vxor.u32 %v313, 2147483648
    %v315 = vmul.f32 %v314, 1.442695
    %v316 = vpow.pop %v315
    %v317 = vadd.f32 %v316, 1.0
    %v318 = vrcp.pop %v317
    %v319 = vmul.f32 1.0, %v318
    %v320 = vtanh.pop %v313
    %v321 = vmul.f32 %v319, %v229
    %323 = vrot.lane.b32.xlu0 %v320, 64
    %v324 = vpop.permute.xlu0 %323
    %v326 = vmul.f32 %v319, %v324
    %328 = vrot.lane.b32.xlu0 %v326, 32
    %v329 = vpop.permute.xlu0 %328
    %v331 = vadd.f32 %v321, %v329
    %v332 = vtanh.pop %v331
    %334 = vrot.lane.b32.xlu0 %v332, 64
    %v335 = vpop.permute.xlu0 %334
    %v337 = vmul.f32 %v319, %v335
    %s338 = scalar_lea.vmem [#allocation2], 4
    %v339 = vld [vmem:[%s338] sm:$0x3]
    %341 = vrot.lane.b32.xlu0 %v337, 32
    %v342 = vpop.permute.xlu0 %341
    %v343 = vsel %vm133, %v342, 0
    %345 = vmatprep.subr.mxu0 0.0
    %346 = vmatpush1.msra.mxu0 %v126
    %347 = vmatprep.subr.mxu0 0.0
    %348 = vmatpush1.msra.mxu0 %v127
    %349 = vmatprep.subr.mxu0 0.0
    %350 = vmatpush1.msra.mxu0 %v128
    %351 = vmatprep.subr.mxu0 0.0
    %352 = vmatpush1.msra.mxu0 %v129
    %353 = vmatprep.subr.mxu0 0.0
    %354 = vmatpush1.msra.mxu0 0.0
    %355 = vmatprep.subr.mxu0 0.0
    %356 = vmatpush1.msra.mxu0 0.0
    %357 = vmatprep.subr.mxu0 0.0
    %358 = vmatpush1.msra.mxu0 0.0
    %359 = vmatprep.subr.mxu0 0.0
    %360 = vmatpush1.msra.mxu0 0.0
    %361 = vmatprep.subr.mxu0 0.0
    %362 = vmatpush1.msra.mxu0 0.0
    %363 = vmatprep.subr.mxu0 0.0
    %364 = vmatpush1.msra.mxu0 0.0
    %365 = vmatprep.subr.mxu0 0.0
    %366 = vmatpush1.msra.mxu0 0.0
    %367 = vmatprep.subr.mxu0 0.0
    %368 = vmatpush1.msra.mxu0 0.0
    %369 = vmatprep.subr.mxu0 0.0
    %370 = vmatpush1.msra.mxu0 0.0
    %371 = vmatprep.subr.mxu0 0.0
    %372 = vmatpush1.msra.mxu0 0.0
    %373 = vmatprep.subr.mxu0 0.0
    %374 = vmatpush1.msra.mxu0 0.0
    %375 = vmatprep.subr.mxu0 0.0
    %376 = vmatpush1.msra.mxu0 0.0
    %377 = vmatprep.subr.mxu0 0.0
    %378 = vmatpush1.msra.mxu0 0.0
    %379 = vmatprep.subr.mxu0 0.0
    %380 = vmatpush1.msra.mxu0 0.0
    %381 = vmatprep.subr.mxu0 0.0
    %382 = vmatpush1.msra.mxu0 0.0
    %383 = vmatprep.subr.mxu0 0.0
    %384 = vmatpush1.msra.mxu0 0.0
    %385 = vmatprep.subr.mxu0 0.0
    %386 = vmatpush1.msra.mxu0 0.0
    %387 = vmatprep.subr.mxu0 0.0
    %388 = vmatpush1.msra.mxu0 0.0
    %389 = vmatprep.subr.mxu0 0.0
    %390 = vmatpush1.msra.mxu0 0.0
    %391 = vmatprep.subr.mxu0 0.0
    %392 = vmatpush1.msra.mxu0 0.0
    %393 = vmatprep.subr.mxu0 0.0
    %394 = vmatpush1.msra.mxu0 0.0
    %395 = vmatprep.subr.mxu0 0.0
    %396 = vmatpush1.msra.mxu0 0.0
    %397 = vmatprep.subr.mxu0 0.0
    %398 = vmatpush1.msra.mxu0 0.0
    %399 = vmatprep.subr.mxu0 0.0
    %400 = vmatpush1.msra.mxu0 0.0
    %401 = vmatprep.subr.mxu0 0.0
    %402 = vmatpush1.msra.mxu0 0.0
    %403 = vmatprep.subr.mxu0 0.0
    %404 = vmatpush1.msra.mxu0 0.0
    %405 = vmatprep.subr.mxu0 0.0
    %406 = vmatpush1.msra.mxu0 0.0
    %407 = vmatprep.subr.mxu0 0.0
    %408 = vmatpush1.msra.mxu0 0.0
    %409 = vmatprep.mubr.f32.mxu0 0.0
    %410 = vmatmul.mubr.f32.gmra.mrb[0].mxu0 %v343
    %v411 = vpop.f32.mrb[0].mxu0
    %v412 = vadd.f32 0.0, %v411
    %v413 = vpop.f32.mrb[0].mxu0
    %414 = vdwg.mxu0
    %v415 = vadd.f32 %v339, %v412
    %v416 = vxor.u32 %v415, 2147483648
    %v417 = vmul.f32 %v416, 1.442695
    %v418 = vpow.pop %v417
    %v419 = vadd.f32 %v418, 1.0
    %v420 = vrcp.pop %v419
    %v421 = vmul.f32 1.0, %v420
    %v422 = vtanh.pop %v415
    %v423 = vmul.f32 %v421, %v331
    %425 = vrot.lane.b32.xlu0 %v422, 64
    %v426 = vpop.permute.xlu0 %425
    %v428 = vmul.f32 %v421, %v426
    %430 = vrot.lane.b32.xlu0 %v428, 32
    %v431 = vpop.permute.xlu0 %430
    %v433 = vadd.f32 %v423, %v431
    %v434 = vtanh.pop %v433
    %436 = vrot.lane.b32.xlu0 %v434, 64
    %v437 = vpop.permute.xlu0 %436
    %v439 = vmul.f32 %v421, %v437
    %s440 = scalar_lea.vmem [#allocation2], 6
    %v441 = vld [vmem:[%s440] sm:$0x3]
    %443 = vrot.lane.b32.xlu0 %v439, 32
    %v444 = vpop.permute.xlu0 %443
    %v445 = vsel %vm133, %v444, 0
    %447 = vmatprep.subr.mxu0 0.0
    %448 = vmatpush1.msra.mxu0 %v126
    %449 = vmatprep.subr.mxu0 0.0
    %450 = vmatpush1.msra.mxu0 %v127
    %451 = vmatprep.subr.mxu0 0.0
    %452 = vmatpush1.msra.mxu0 %v128
    %453 = vmatprep.subr.mxu0 0.0
    %454 = vmatpush1.msra.mxu0 %v129
    %455 = vmatprep.subr.mxu0 0.0
    %456 = vmatpush1.msra.mxu0 0.0
    %457 = vmatprep.subr.mxu0 0.0
    %458 = vmatpush1.msra.mxu0 0.0
    %459 = vmatprep.subr.mxu0 0.0
    %460 = vmatpush1.msra.mxu0 0.0
    %461 = vmatprep.subr.mxu0 0.0
    %462 = vmatpush1.msra.mxu0 0.0
    %463 = vmatprep.subr.mxu0 0.0
    %464 = vmatpush1.msra.mxu0 0.0
    %465 = vmatprep.subr.mxu0 0.0
    %466 = vmatpush1.msra.mxu0 0.0
    %467 = vmatprep.subr.mxu0 0.0
    %468 = vmatpush1.msra.mxu0 0.0
    %469 = vmatprep.subr.mxu0 0.0
    %470 = vmatpush1.msra.mxu0 0.0
    %471 = vmatprep.subr.mxu0 0.0
    %472 = vmatpush1.msra.mxu0 0.0
    %473 = vmatprep.subr.mxu0 0.0
    %474 = vmatpush1.msra.mxu0 0.0
    %475 = vmatprep.subr.mxu0 0.0
    %476 = vmatpush1.msra.mxu0 0.0
    %477 = vmatprep.subr.mxu0 0.0
    %478 = vmatpush1.msra.mxu0 0.0
    %479 = vmatprep.subr.mxu0 0.0
    %480 = vmatpush1.msra.mxu0 0.0
    %481 = vmatprep.subr.mxu0 0.0
    %482 = vmatpush1.msra.mxu0 0.0
    %483 = vmatprep.subr.mxu0 0.0
    %484 = vmatpush1.msra.mxu0 0.0
    %485 = vmatprep.subr.mxu0 0.0
    %486 = vmatpush1.msra.mxu0 0.0
    %487 = vmatprep.subr.mxu0 0.0
    %488 = vmatpush1.msra.mxu0 0.0
    %489 = vmatprep.subr.mxu0 0.0
    %490 = vmatpush1.msra.mxu0 0.0
    %491 = vmatprep.subr.mxu0 0.0
    %492 = vmatpush1.msra.mxu0 0.0
    %493 = vmatprep.subr.mxu0 0.0
    %494 = vmatpush1.msra.mxu0 0.0
    %495 = vmatprep.subr.mxu0 0.0
    %496 = vmatpush1.msra.mxu0 0.0
    %497 = vmatprep.subr.mxu0 0.0
    %498 = vmatpush1.msra.mxu0 0.0
    %499 = vmatprep.subr.mxu0 0.0
    %500 = vmatpush1.msra.mxu0 0.0
    %501 = vmatprep.subr.mxu0 0.0
    %502 = vmatpush1.msra.mxu0 0.0
    %503 = vmatprep.subr.mxu0 0.0
    %504 = vmatpush1.msra.mxu0 0.0
    %505 = vmatprep.subr.mxu0 0.0
    %506 = vmatpush1.msra.mxu0 0.0
    %507 = vmatprep.subr.mxu0 0.0
    %508 = vmatpush1.msra.mxu0 0.0
    %509 = vmatprep.subr.mxu0 0.0
    %510 = vmatpush1.msra.mxu0 0.0
    %511 = vmatprep.mubr.f32.mxu0 0.0
    %512 = vmatmul.mubr.f32.gmra.mrb[0].mxu0 %v445
    %v513 = vpop.f32.mrb[0].mxu0
    %v514 = vadd.f32 0.0, %v513
    %v515 = vpop.f32.mrb[0].mxu0
    %516 = vdwg.mxu0
    %v517 = vadd.f32 %v441, %v514
    %v518 = vxor.u32 %v517, 2147483648
    %v519 = vmul.f32 %v518, 1.442695
    %v520 = vpow.pop %v519
    %v521 = vadd.f32 %v520, 1.0
    %v522 = vrcp.pop %v521
    %v523 = vmul.f32 1.0, %v522
    %v524 = vtanh.pop %v517
    %v525 = vmul.f32 %v523, %v433
    %527 = vrot.lane.b32.xlu0 %v524, 64
    %v528 = vpop.permute.xlu0 %527
    %v530 = vmul.f32 %v523, %v528
    %532 = vrot.lane.b32.xlu0 %v530, 32
    %v533 = vpop.permute.xlu0 %532
    %v535 = vadd.f32 %v525, %v533
    %v536 = vtanh.pop %v535
    %538 = vrot.lane.b32.xlu0 %v536, 64
    %v539 = vpop.permute.xlu0 %538
    %v541 = vmul.f32 %v523, %v539
    %s542 = scalar_lea.vmem [#allocation2], 8
    %v543 = vld [vmem:[%s542] sm:$0x3]
    %545 = vrot.lane.b32.xlu0 %v541, 32
    %v546 = vpop.permute.xlu0 %545
    %v547 = vsel %vm133, %v546, 0
    %549 = vmatprep.subr.mxu0 0.0
    %550 = vmatpush1.msra.mxu0 %v126
    %551 = vmatprep.subr.mxu0 0.0
    %552 = vmatpush1.msra.mxu0 %v127
    %553 = vmatprep.subr.mxu0 0.0
    %554 = vmatpush1.msra.mxu0 %v128
    %555 = vmatprep.subr.mxu0 0.0
    %556 = vmatpush1.msra.mxu0 %v129
    %557 = vmatprep.subr.mxu0 0.0
    %558 = vmatpush1.msra.mxu0 0.0
    %559 = vmatprep.subr.mxu0 0.0
    %560 = vmatpush1.msra.mxu0 0.0
    %561 = vmatprep.subr.mxu0 0.0
    %562 = vmatpush1.msra.mxu0 0.0
    %563 = vmatprep.subr.mxu0 0.0
    %564 = vmatpush1.msra.mxu0 0.0
    %565 = vmatprep.subr.mxu0 0.0
    %566 = vmatpush1.msra.mxu0 0.0
    %567 = vmatprep.subr.mxu0 0.0
    %568 = vmatpush1.msra.mxu0 0.0
    %569 = vmatprep.subr.mxu0 0.0
    %570 = vmatpush1.msra.mxu0 0.0
    %571 = vmatprep.subr.mxu0 0.0
    %572 = vmatpush1.msra.mxu0 0.0
    %573 = vmatprep.subr.mxu0 0.0
    %574 = vmatpush1.msra.mxu0 0.0
    %575 = vmatprep.subr.mxu0 0.0
    %576 = vmatpush1.msra.mxu0 0.0
    %577 = vmatprep.subr.mxu0 0.0
    %578 = vmatpush1.msra.mxu0 0.0
    %579 = vmatprep.subr.mxu0 0.0
    %580 = vmatpush1.msra.mxu0 0.0
    %581 = vmatprep.subr.mxu0 0.0
    %582 = vmatpush1.msra.mxu0 0.0
    %583 = vmatprep.subr.mxu0 0.0
    %584 = vmatpush1.msra.mxu0 0.0
    %585 = vmatprep.subr.mxu0 0.0
    %586 = vmatpush1.msra.mxu0 0.0
    %587 = vmatprep.subr.mxu0 0.0
    %588 = vmatpush1.msra.mxu0 0.0
    %589 = vmatprep.subr.mxu0 0.0
    %590 = vmatpush1.msra.mxu0 0.0
    %591 = vmatprep.subr.mxu0 0.0
    %592 = vmatpush1.msra.mxu0 0.0
    %593 = vmatprep.subr.mxu0 0.0
    %594 = vmatpush1.msra.mxu0 0.0
    %595 = vmatprep.subr.mxu0 0.0
    %596 = vmatpush1.msra.mxu0 0.0
    %597 = vmatprep.subr.mxu0 0.0
    %598 = vmatpush1.msra.mxu0 0.0
    %599 = vmatprep.subr.mxu0 0.0
    %600 = vmatpush1.msra.mxu0 0.0
    %601 = vmatprep.subr.mxu0 0.0
    %602 = vmatpush1.msra.mxu0 0.0
    %603 = vmatprep.subr.mxu0 0.0
    %604 = vmatpush1.msra.mxu0 0.0
    %605 = vmatprep.subr.mxu0 0.0
    %606 = vmatpush1.msra.mxu0 0.0
    %607 = vmatprep.subr.mxu0 0.0
    %608 = vmatpush1.msra.mxu0 0.0
    %609 = vmatprep.subr.mxu0 0.0
    %610 = vmatpush1.msra.mxu0 0.0
    %611 = vmatprep.subr.mxu0 0.0
    %612 = vmatpush1.msra.mxu0 0.0
    %613 = vmatprep.mubr.f32.mxu0 0.0
    %614 = vmatmul.mubr.f32.gmra.mrb[0].mxu0 %v547
    %v615 = vpop.f32.mrb[0].mxu0
    %v616 = vadd.f32 0.0, %v615
    %v617 = vpop.f32.mrb[0].mxu0
    %618 = vdwg.mxu0
    %v619 = vadd.f32 %v543, %v616
    %v620 = vxor.u32 %v619, 2147483648
    %v621 = vmul.f32 %v620, 1.442695
    %v622 = vpow.pop %v621
    %v623 = vadd.f32 %v622, 1.0
    %v624 = vrcp.pop %v623
    %v625 = vmul.f32 1.0, %v624
    %v626 = vtanh.pop %v619
    %v627 = vmul.f32 %v625, %v535
    %629 = vrot.lane.b32.xlu0 %v626, 64
    %v630 = vpop.permute.xlu0 %629
    %v632 = vmul.f32 %v625, %v630
    %634 = vrot.lane.b32.xlu0 %v632, 32
    %v635 = vpop.permute.xlu0 %634
    %v637 = vadd.f32 %v627, %v635
    %v638 = vtanh.pop %v637
    %640 = vrot.lane.b32.xlu0 %v638, 64
    %v641 = vpop.permute.xlu0 %640
    %v643 = vmul.f32 %v625, %v641
    %s644 = scalar_lea.vmem [#allocation2], 10
    %v645 = vld [vmem:[%s644] sm:$0x3]
    %647 = vrot.lane.b32.xlu0 %v643, 32
    %v648 = vpop.permute.xlu0 %647
    %v649 = vsel %vm133, %v648, 0
    %651 = vmatprep.subr.mxu0 0.0
    %652 = vmatpush1.msra.mxu0 %v126
    %653 = vmatprep.subr.mxu0 0.0
    %654 = vmatpush1.msra.mxu0 %v127
    %655 = vmatprep.subr.mxu0 0.0
    %656 = vmatpush1.msra.mxu0 %v128
    %657 = vmatprep.subr.mxu0 0.0
    %658 = vmatpush1.msra.mxu0 %v129
    %659 = vmatprep.subr.mxu0 0.0
    %660 = vmatpush1.msra.mxu0 0.0
    %661 = vmatprep.subr.mxu0 0.0
    %662 = vmatpush1.msra.mxu0 0.0
    %663 = vmatprep.subr.mxu0 0.0
    %664 = vmatpush1.msra.mxu0 0.0
    %665 = vmatprep.subr.mxu0 0.0
    %666 = vmatpush1.msra.mxu0 0.0
    %667 = vmatprep.subr.mxu0 0.0
    %668 = vmatpush1.msra.mxu0 0.0
    %669 = vmatprep.subr.mxu0 0.0
    %670 = vmatpush1.msra.mxu0 0.0
    %671 = vmatprep.subr.mxu0 0.0
    %672 = vmatpush1.msra.mxu0 0.0
    %673 = vmatprep.subr.mxu0 0.0
    %674 = vmatpush1.msra.mxu0 0.0
    %675 = vmatprep.subr.mxu0 0.0
    %676 = vmatpush1.msra.mxu0 0.0
    %677 = vmatprep.subr.mxu0 0.0
    %678 = vmatpush1.msra.mxu0 0.0
    %679 = vmatprep.subr.mxu0 0.0
    %680 = vmatpush1.msra.mxu0 0.0
    %681 = vmatprep.subr.mxu0 0.0
    %682 = vmatpush1.msra.mxu0 0.0
    %683 = vmatprep.subr.mxu0 0.0
    %684 = vmatpush1.msra.mxu0 0.0
    %685 = vmatprep.subr.mxu0 0.0
    %686 = vmatpush1.msra.mxu0 0.0
    %687 = vmatprep.subr.mxu0 0.0
    %688 = vmatpush1.msra.mxu0 0.0
    %689 = vmatprep.subr.mxu0 0.0
    %690 = vmatpush1.msra.mxu0 0.0
    %691 = vmatprep.subr.mxu0 0.0
    %692 = vmatpush1.msra.mxu0 0.0
    %693 = vmatprep.subr.mxu0 0.0
    %694 = vmatpush1.msra.mxu0 0.0
    %695 = vmatprep.subr.mxu0 0.0
    %696 = vmatpush1.msra.mxu0 0.0
    %697 = vmatprep.subr.mxu0 0.0
    %698 = vmatpush1.msra.mxu0 0.0
    %699 = vmatprep.subr.mxu0 0.0
    %700 = vmatpush1.msra.mxu0 0.0
    %701 = vmatprep.subr.mxu0 0.0
    %702 = vmatpush1.msra.mxu0 0.0
    %703 = vmatprep.subr.mxu0 0.0
    %704 = vmatpush1.msra.mxu0 0.0
    %705 = vmatprep.subr.mxu0 0.0
    %706 = vmatpush1.msra.mxu0 0.0
    %707 = vmatprep.subr.mxu0 0.0
    %708 = vmatpush1.msra.mxu0 0.0
    %709 = vmatprep.subr.mxu0 0.0
    %710 = vmatpush1.msra.mxu0 0.0
    %711 = vmatprep.subr.mxu0 0.0
    %712 = vmatpush1.msra.mxu0 0.0
    %713 = vmatprep.subr.mxu0 0.0
    %714 = vmatpush1.msra.mxu0 0.0
    %715 = vmatprep.mubr.f32.mxu0 0.0
    %716 = vmatmul.mubr.f32.gmra.mrb[0].mxu0 %v649
    %v717 = vpop.f32.mrb[0].mxu0
    %v718 = vadd.f32 0.0, %v717
    %v719 = vpop.f32.mrb[0].mxu0
    %720 = vdwg.mxu0
    %v721 = vadd.f32 %v645, %v718
    %v722 = vxor.u32 %v721, 2147483648
    %v723 = vmul.f32 %v722, 1.442695
    %v724 = vpow.pop %v723
    %v725 = vadd.f32 %v724, 1.0
    %v726 = vrcp.pop %v725
    %v727 = vmul.f32 1.0, %v726
    %v728 = vtanh.pop %v721
    %v729 = vmul.f32 %v727, %v637
    %731 = vrot.lane.b32.xlu0 %v728, 64
    %v732 = vpop.permute.xlu0 %731
    %v734 = vmul.f32 %v727, %v732
    %736 = vrot.lane.b32.xlu0 %v734, 32
    %v737 = vpop.permute.xlu0 %736
    %v739 = vadd.f32 %v729, %v737
    %v740 = vtanh.pop %v739
    %742 = vrot.lane.b32.xlu0 %v740, 64
    %v743 = vpop.permute.xlu0 %742
    %v745 = vmul.f32 %v727, %v743
    %s746 = scalar_lea.vmem [#allocation2], 12
    %v747 = vld [vmem:[%s746] sm:$0x3]
    %749 = vrot.lane.b32.xlu0 %v745, 32
    %v750 = vpop.permute.xlu0 %749
    %v751 = vsel %vm133, %v750, 0
    %753 = vmatprep.subr.mxu0 0.0
    %754 = vmatpush1.msra.mxu0 %v126
    %755 = vmatprep.subr.mxu0 0.0
    %756 = vmatpush1.msra.mxu0 %v127
    %757 = vmatprep.subr.mxu0 0.0
    %758 = vmatpush1.msra.mxu0 %v128
    %759 = vmatprep.subr.mxu0 0.0
    %760 = vmatpush1.msra.mxu0 %v129
    %761 = vmatprep.subr.mxu0 0.0
    %762 = vmatpush1.msra.mxu0 0.0
    %763 = vmatprep.subr.mxu0 0.0
    %764 = vmatpush1.msra.mxu0 0.0
    %765 = vmatprep.subr.mxu0 0.0
    %766 = vmatpush1.msra.mxu0 0.0
    %767 = vmatprep.subr.mxu0 0.0
    %768 = vmatpush1.msra.mxu0 0.0
    %769 = vmatprep.subr.mxu0 0.0
    %770 = vmatpush1.msra.mxu0 0.0
    %771 = vmatprep.subr.mxu0 0.0
    %772 = vmatpush1.msra.mxu0 0.0
    %773 = vmatprep.subr.mxu0 0.0
    %774 = vmatpush1.msra.mxu0 0.0
    %775 = vmatprep.subr.mxu0 0.0
    %776 = vmatpush1.msra.mxu0 0.0
    %777 = vmatprep.subr.mxu0 0.0
    %778 = vmatpush1.msra.mxu0 0.0
    %779 = vmatprep.subr.mxu0 0.0
    %780 = vmatpush1.msra.mxu0 0.0
    %781 = vmatprep.subr.mxu0 0.0
    %782 = vmatpush1.msra.mxu0 0.0
    %783 = vmatprep.subr.mxu0 0.0
    %784 = vmatpush1.msra.mxu0 0.0
    %785 = vmatprep.subr.mxu0 0.0
    %786 = vmatpush1.msra.mxu0 0.0
    %787 = vmatprep.subr.mxu0 0.0
    %788 = vmatpush1.msra.mxu0 0.0
    %789 = vmatprep.subr.mxu0 0.0
    %790 = vmatpush1.msra.mxu0 0.0
    %791 = vmatprep.subr.mxu0 0.0
    %792 = vmatpush1.msra.mxu0 0.0
    %793 = vmatprep.subr.mxu0 0.0
    %794 = vmatpush1.msra.mxu0 0.0
    %795 = vmatprep.subr.mxu0 0.0
    %796 = vmatpush1.msra.mxu0 0.0
    %797 = vmatprep.subr.mxu0 0.0
    %798 = vmatpush1.msra.mxu0 0.0
    %799 = vmatprep.subr.mxu0 0.0
    %800 = vmatpush1.msra.mxu0 0.0
    %801 = vmatprep.subr.mxu0 0.0
    %802 = vmatpush1.msra.mxu0 0.0
    %803 = vmatprep.subr.mxu0 0.0
    %804 = vmatpush1.msra.mxu0 0.0
    %805 = vmatprep.subr.mxu0 0.0
    %806 = vmatpush1.msra.mxu0 0.0
    %807 = vmatprep.subr.mxu0 0.0
    %808 = vmatpush1.msra.mxu0 0.0
    %809 = vmatprep.subr.mxu0 0.0
    %810 = vmatpush1.msra.mxu0 0.0
    %811 = vmatprep.subr.mxu0 0.0
    %812 = vmatpush1.msra.mxu0 0.0
    %813 = vmatprep.subr.mxu0 0.0
    %814 = vmatpush1.msra.mxu0 0.0
    %815 = vmatprep.subr.mxu0 0.0
    %816 = vmatpush1.msra.mxu0 0.0
    %817 = vmatprep.mubr.f32.mxu0 0.0
    %818 = vmatmul.mubr.f32.gmra.mrb[0].mxu0 %v751
    %v819 = vpop.f32.mrb[0].mxu0
    %v820 = vadd.f32 0.0, %v819
    %v821 = vpop.f32.mrb[0].mxu0
    %822 = vdwg.mxu0
    %v823 = vadd.f32 %v747, %v820
    %v824 = vxor.u32 %v823, 2147483648
    %v825 = vmul.f32 %v824, 1.442695
    %v826 = vpow.pop %v825
    %v827 = vadd.f32 %v826, 1.0
    %v828 = vrcp.pop %v827
    %v829 = vmul.f32 1.0, %v828
    %v830 = vtanh.pop %v823
    %v831 = vmul.f32 %v829, %v739
    %833 = vrot.lane.b32.xlu0 %v830, 64
    %v834 = vpop.permute.xlu0 %833
    %v836 = vmul.f32 %v829, %v834
    %838 = vrot.lane.b32.xlu0 %v836, 32
    %v839 = vpop.permute.xlu0 %838
    %v841 = vadd.f32 %v831, %v839
    %v842 = vtanh.pop %v841
    %844 = vrot.lane.b32.xlu0 %v842, 64
    %v845 = vpop.permute.xlu0 %844
    %v847 = vmul.f32 %v829, %v845
    %s848 = scalar_lea.vmem [#allocation2], 14
    %v849 = vld [vmem:[%s848] sm:$0x3]
    %851 = vrot.lane.b32.xlu0 %v847, 32
    %v852 = vpop.permute.xlu0 %851
    %v853 = vsel %vm133, %v852, 0
    %855 = vmatprep.subr.mxu0 0.0
    %856 = vmatpush1.msra.mxu0 %v126
    %857 = vmatprep.subr.mxu0 0.0
    %858 = vmatpush1.msra.mxu0 %v127
    %859 = vmatprep.subr.mxu0 0.0
    %860 = vmatpush1.msra.mxu0 %v128
    %861 = vmatprep.subr.mxu0 0.0
    %862 = vmatpush1.msra.mxu0 %v129
    %863 = vmatprep.subr.mxu0 0.0
    %864 = vmatpush1.msra.mxu0 0.0
    %865 = vmatprep.subr.mxu0 0.0
    %866 = vmatpush1.msra.mxu0 0.0
    %867 = vmatprep.subr.mxu0 0.0
    %868 = vmatpush1.msra.mxu0 0.0
    %869 = vmatprep.subr.mxu0 0.0
    %870 = vmatpush1.msra.mxu0 0.0
    %871 = vmatprep.subr.mxu0 0.0
    %872 = vmatpush1.msra.mxu0 0.0
    %873 = vmatprep.subr.mxu0 0.0
    %874 = vmatpush1.msra.mxu0 0.0
    %875 = vmatprep.subr.mxu0 0.0
    %876 = vmatpush1.msra.mxu0 0.0
    %877 = vmatprep.subr.mxu0 0.0
    %878 = vmatpush1.msra.mxu0 0.0
    %879 = vmatprep.subr.mxu0 0.0
    %880 = vmatpush1.msra.mxu0 0.0
    %881 = vmatprep.subr.mxu0 0.0
    %882 = vmatpush1.msra.mxu0 0.0
    %883 = vmatprep.subr.mxu0 0.0
    %884 = vmatpush1.msra.mxu0 0.0
    %885 = vmatprep.subr.mxu0 0.0
    %886 = vmatpush1.msra.mxu0 0.0
    %887 = vmatprep.subr.mxu0 0.0
    %888 = vmatpush1.msra.mxu0 0.0
    %889 = vmatprep.subr.mxu0 0.0
    %890 = vmatpush1.msra.mxu0 0.0
    %891 = vmatprep.subr.mxu0 0.0
    %892 = vmatpush1.msra.mxu0 0.0
    %893 = vmatprep.subr.mxu0 0.0
    %894 = vmatpush1.msra.mxu0 0.0
    %895 = vmatprep.subr.mxu0 0.0
    %896 = vmatpush1.msra.mxu0 0.0
    %897 = vmatprep.subr.mxu0 0.0
    %898 = vmatpush1.msra.mxu0 0.0
    %899 = vmatprep.subr.mxu0 0.0
    %900 = vmatpush1.msra.mxu0 0.0
    %901 = vmatprep.subr.mxu0 0.0
    %902 = vmatpush1.msra.mxu0 0.0
    %903 = vmatprep.subr.mxu0 0.0
    %904 = vmatpush1.msra.mxu0 0.0
    %905 = vmatprep.subr.mxu0 0.0
    %906 = vmatpush1.msra.mxu0 0.0
    %907 = vmatprep.subr.mxu0 0.0
    %908 = vmatpush1.msra.mxu0 0.0
    %909 = vmatprep.subr.mxu0 0.0
    %910 = vmatpush1.msra.mxu0 0.0
    %911 = vmatprep.subr.mxu0 0.0
    %912 = vmatpush1.msra.mxu0 0.0
    %913 = vmatprep.subr.mxu0 0.0
    %914 = vmatpush1.msra.mxu0 0.0
    %915 = vmatprep.subr.mxu0 0.0
    %916 = vmatpush1.msra.mxu0 0.0
    %917 = vmatprep.subr.mxu0 0.0
    %918 = vmatpush1.msra.mxu0 0.0
    %919 = vmatprep.mubr.f32.mxu0 0.0
    %920 = vmatmul.mubr.f32.gmra.mrb[0].mxu0 %v853
    %v921 = vpop.f32.mrb[0].mxu0
    %v922 = vadd.f32 0.0, %v921
    %v923 = vpop.f32.mrb[0].mxu0
    %924 = vdwg.mxu0
    %v925 = vadd.f32 %v849, %v922
    %v926 = vxor.u32 %v925, 2147483648
    %v927 = vmul.f32 %v926, 1.442695
    %v928 = vpow.pop %v927
    %v929 = vadd.f32 %v928, 1.0
    %v930 = vrcp.pop %v929
    %v931 = vmul.f32 1.0, %v930
    %v932 = vtanh.pop %v925
    %v933 = vmul.f32 %v931, %v841
    %935 = vrot.lane.b32.xlu0 %v932, 64
    %v936 = vpop.permute.xlu0 %935
    %v938 = vmul.f32 %v931, %v936
    %940 = vrot.lane.b32.xlu0 %v938, 32
    %v941 = vpop.permute.xlu0 %940
    %v943 = vadd.f32 %v933, %v941
    %v944 = vtanh.pop %v943
    %946 = vrot.lane.b32.xlu0 %v944, 64
    %v947 = vpop.permute.xlu0 %946
    %v949 = vmul.f32 %v931, %v947
    %951 = vrot.lane.b32.xlu0 %v949, 32
    %v952 = vpop.permute.xlu0 %951
    %vm954 = vcmask 254976
    %955 = vst.msk [vmem:[#allocation4] sm:$0x3] %vm954, %v952
    %957 = vrot.lane.b32.xlu0 %v943, 96
    %v958 = vpop.permute.xlu0 %957
    %960 = vst.msk [vmem:[#allocation3] sm:$0x3] %vm954, %v958
    // Predicated region
    $region22: #{encoder_forward.1} parent=1 // pred_check
      _
    $region23: #{encoder_forward.1} parent=1 // pred_check_branch
      %962 = sbr.rel (0) target = $region25
    $region24: #{encoder_forward.1} parent=1 // pred_region
      %s964 = ssub.s32 32, 32
      %965 = vsyncadd [#allocation5], %s964
      %s967 = sshll.u32 [#allocation4], 4
      %s968 = int_to_ptr.vmem [resolvable:$true] %s967
      %970 = dma.vmem_to_hbm [thread:$0]  %s968, 32, %s4, [#allocation5]
    $region25: #{encoder_forward.1} parent=1 // pred_fallthru
      _
    // Predicated region
    $region26: #{encoder_forward.1} parent=1 // pred_check
      _
    $region27: #{encoder_forward.1} parent=1 // pred_check_branch
      %972 = sbr.rel (0) target = $region29
    $region28: #{encoder_forward.1} parent=1 // pred_region
      %973 = dma.done [#allocation5], 32
    $region29: #{encoder_forward.1} parent=1 // pred_fallthru
      _
    %974 = vsyncpa [#allocation5], 1

</llo_original>
